<compile_context>
chip_gen: v7x
topology: tpu7x:2x2x1
jax: 0.10.0
libtpu: 0.0.40
codegen_flags: <defaults>
</compile_context>

<pallas_src>
import functools

import jax
import jax.numpy as jnp
from jax.experimental import pallas as pl
from jax.experimental.pallas import tpu as pltpu

HIDDEN = 256       # hidden width of each Q head (fc1/fc2 and fc4/fc5)
OUT_LANES = 128    # lane-padded width used for the last-layer MXU matmuls
MAX_TILE_B = 1024  # default batch-tile cap


def _round_up(x, m):
    return ((x + m - 1) // m) * m


def _choose_tile(batch, max_tile):
    """Pick the batch tile: small batches -> one tiny block (latency path);
    larger batches -> big tiles, aiming for >= 2 grid steps (v7x megacore)."""
    b8 = _round_up(batch, 8)
    if b8 <= max_tile // 2:
        return b8
    half = _round_up((b8 + 1) // 2, 8)
    return min(max_tile, half)


def _critic_kernel(s_ref, a_ref,
                   ws_ref, wa_ref, b14_ref,     # fused fc1 || fc4 (row-split)
                   w2_ref, b2_ref,              # fc2
                   w5_ref, b5_ref,              # fc5
                   w3p_ref, w6p_ref, b36_ref,   # fc3 / fc6, lane-padded to 128
                   o_ref):
    cdt = s_ref.dtype  # compute dtype for MXU operands (bf16 or f32)

    # fc1 || fc4: two narrow-K matmuls (state, action) into one wide 512-lane
    # f32 accumulator; bias + ReLU stay in f32.
    h = (jnp.dot(s_ref[...], ws_ref[...], preferred_element_type=jnp.float32)
         + jnp.dot(a_ref[...], wa_ref[...], preferred_element_type=jnp.float32))
    h = jnp.maximum(h + b14_ref[...], 0.0)                        # [TB, 512] f32
    h1 = h[:, :HIDDEN].astype(cdt)                                # Q1 hidden
    h2 = h[:, HIDDEN:].astype(cdt)                                # Q2 hidden

    # fc2 / fc5 (kept separate).
    g1 = jnp.maximum(
        jnp.dot(h1, w2_ref[...], preferred_element_type=jnp.float32)
        + b2_ref[...], 0.0).astype(cdt)
    g2 = jnp.maximum(
        jnp.dot(h2, w5_ref[...], preferred_element_type=jnp.float32)
        + b5_ref[...], 0.0).astype(cdt)

    # fc3 / fc6: two [TB,256]@[256,128] matmuls (col 0 = q1, col 1 = q2); no
    # in-kernel concat.  Only the first 2 lanes are stored to HBM.
    res = (jnp.dot(g1, w3p_ref[...], preferred_element_type=jnp.float32)
           + jnp.dot(g2, w6p_ref[...], preferred_element_type=jnp.float32))
    o_ref[...] = res[:, :2] + b36_ref[...]                        # [TB, 2] f32


def _resident(shape):
    """Same block index every grid step -> weight stays resident in VMEM."""
    return pl.BlockSpec(shape, lambda i: (0, 0))


@functools.partial(jax.jit, static_argnames=("compute_dtype", "max_tile_b"))
def critic_td3_forward(state, action, params,
                       compute_dtype=jnp.bfloat16, max_tile_b=MAX_TILE_B):
    """Returns (q1, q2), each [batch, 1] float32 — matches Critic_TD3.forward.

    compute_dtype=jnp.bfloat16 (default on all generations) halves weight /
    activation DMA and triples MXU operand rate; accumulation stays float32
    (~1e-2 relative error on Q values).  Pass jnp.float32 for bit-accuracy.
    """
    (w1, b1, w2, b2, w3, b3, w4, b4, w5, b5, w6, b6) = params
    batch, sd = state.shape
    ad = action.shape[1]

    state_c = state.astype(compute_dtype)
    action_c = action.astype(compute_dtype)

    # ---- pack fused weights (tiny plain-JAX glue) ----
    w14 = jnp.concatenate([w1, w4], axis=1).astype(compute_dtype)       # [in, 512]
    ws, wa = w14[:sd], w14[sd:]                                         # row split
    b14 = jnp.concatenate([b1, b4], axis=1).astype(jnp.float32)         # [1, 512]
    w3p = jnp.pad(w3, ((0, 0), (0, OUT_LANES - 1))).astype(compute_dtype)  # col 0
    w6p = jnp.pad(w6, ((0, 0), (1, OUT_LANES - 2))).astype(compute_dtype)  # col 1
    b36 = jnp.concatenate([b3, b6], axis=1).astype(jnp.float32)         # [1, 2]
    w2c, w5c = w2.astype(compute_dtype), w5.astype(compute_dtype)
    b2c, b5c = b2.astype(jnp.float32), b5.astype(jnp.float32)

    # ---- tiling: no input padding; boundary blocks are clipped/padded by Pallas,
    # padded output rows are discarded by the [:batch] slice below. ----
    tile_b = _choose_tile(batch, max_tile_b)
    grid_steps = pl.cdiv(batch, tile_b)
    padded_b = grid_steps * tile_b

    out = pl.pallas_call(
        _critic_kernel,
        out_shape=jax.ShapeDtypeStruct((padded_b, 2), jnp.float32),
        grid=(grid_steps,),
        in_specs=[
            pl.BlockSpec((tile_b, sd), lambda i: (i, 0)),    # state (batch-tiled)
            pl.BlockSpec((tile_b, ad), lambda i: (i, 0)),    # action (batch-tiled)
            _resident((sd, 2 * HIDDEN)),                     # ws
            _resident((ad, 2 * HIDDEN)),                     # wa
            _resident((1, 2 * HIDDEN)),                      # b14
            _resident((HIDDEN, HIDDEN)),                     # w2
            _resident((1, HIDDEN)),                          # b2
            _resident((HIDDEN, HIDDEN)),                     # w5
            _resident((1, HIDDEN)),                          # b5
            _resident((HIDDEN, OUT_LANES)),                  # w3 (lane-padded)
            _resident((HIDDEN, OUT_LANES)),                  # w6 (lane-padded)
            _resident((1, 2)),                               # b36
        ],
        out_specs=pl.BlockSpec((tile_b, 2), lambda i: (i, 0)),
        compiler_params=pltpu.CompilerParams(
            dimension_semantics=("parallel",)),
    )(state_c, action_c, ws, wa, b14, w2c, b2c, w5c, b5c, w3p, w6p, b36)

    q1 = out[:batch, 0:1]
    q2 = out[:batch, 1:2]
    return q1, q2


def init_params(key, state_dim, action_dim, hidden=HIDDEN):
    """Deterministic init; weights stored as [in, out], biases as [1, out]."""
    in_dim = state_dim + action_dim
    dims = [
        (in_dim, hidden), (hidden, hidden), (hidden, 1),   # Q1: fc1, fc2, fc3
        (in_dim, hidden), (hidden, hidden), (hidden, 1),   # Q2: fc4, fc5, fc6
    ]
    params = []
    for i, (din, dout) in enumerate(dims):
        kw, kb = jax.random.split(jax.random.fold_in(key, i))
        bound = 1.0 / jnp.sqrt(din)  # PyTorch nn.Linear default uniform bound
        w = jax.random.uniform(kw, (din, dout), jnp.float32, -bound, bound)
        b = jax.random.uniform(kb, (1, dout), jnp.float32, -bound, bound)
        params.extend([w, b])
    return tuple(params)


def _reference_forward(state, action, params):
    """Plain-JAX reference for correctness check."""
    (w1, b1, w2, b2, w3, b3, w4, b4, w5, b5, w6, b6) = params
    sa = jnp.concatenate([state, action], axis=1)
    h1 = jnp.maximum(sa @ w1 + b1, 0.0)
    h1 = jnp.maximum(h1 @ w2 + b2, 0.0)
    q1 = h1 @ w3 + b3
    h2 = jnp.maximum(sa @ w4 + b4, 0.0)
    h2 = jnp.maximum(h2 @ w5 + b5, 0.0)
    q2 = h2 @ w6 + b6
    return q1, q2


if __name__ == "__main__":
    key = jax.random.PRNGKey(0)
    k_state, k_action, k_params = jax.random.split(key, 3)

    state_dim, action_dim = 12, 4
    params = init_params(k_params, state_dim, action_dim)

    # --- small batch (actor-inference latency path), f32 exactness ---
    batch = 2
    state = jax.random.normal(k_state, (batch, state_dim), jnp.float32)
    action = jax.random.normal(k_action, (batch, action_dim), jnp.float32)
    q1, q2 = jax.block_until_ready(
        critic_td3_forward(state, action, params, compute_dtype=jnp.float32))
    q1_ref, q2_ref = _reference_forward(state, action, params)
    assert q1.shape == (batch, 1) and q2.shape == (batch, 1)
    assert jnp.allclose(q1, q1_ref, atol=1e-4, rtol=1e-4)
    assert jnp.allclose(q2, q2_ref, atol=1e-4, rtol=1e-4)

    # --- small batch, default bf16 path ---
    q1h, q2h = jax.block_until_ready(critic_td3_forward(state, action, params))
    assert jnp.allclose(q1h, q1_ref, atol=5e-2, rtol=5e-2)
    assert jnp.allclose(q2h, q2_ref, atol=5e-2, rtol=5e-2)

    # --- mid-size batch: single large tile, f32 ---
    batch2 = 300
    state2 = jax.random.normal(jax.random.fold_in(k_state, 1),
                               (batch2, state_dim), jnp.float32)
    action2 = jax.random.normal(jax.random.fold_in(k_action, 1),
                                (batch2, action_dim), jnp.float32)
    q1b, q2b = jax.block_until_ready(
        critic_td3_forward(state2, action2, params, compute_dtype=jnp.float32))
    q1b_ref, q2b_ref = _reference_forward(state2, action2, params)
    assert q1b.shape == (batch2, 1) and q2b.shape == (batch2, 1)
    assert jnp.allclose(q1b, q1b_ref, atol=1e-4, rtol=1e-4)
    assert jnp.allclose(q2b, q2b_ref, atol=1e-4, rtol=1e-4)

    # --- large batch: multi-step grid + ragged last block, bf16 default ---
    batch3 = 2500
    state3 = jax.random.normal(jax.random.fold_in(k_state, 2),
                               (batch3, state_dim), jnp.float32)
    action3 = jax.random.normal(jax.random.fold_in(k_action, 2),
                                (batch3, action_dim), jnp.float32)
    q1c, q2c = jax.block_until_ready(critic_td3_forward(state3, action3, params))
    q1c_ref, q2c_ref = _reference_forward(state3, action3, params)
    assert q1c.shape == (batch3, 1) and q2c.shape == (batch3, 1)
    assert jnp.allclose(q1c, q1c_ref, atol=5e-2, rtol=5e-2)
    assert jnp.allclose(q2c, q2c_ref, atol=5e-2, rtol=5e-2)

    print("KERNEL_OK")
</pallas_src>

<mosaic_0001>
module attributes {stable_mosaic.version = 11 : i64} {
  func.func @_critic_kernel(%arg0: i32, %arg1: memref<8x12xf32, #tpu.memory_space<vmem>>, %arg2: memref<8x4xf32, #tpu.memory_space<vmem>>, %arg3: memref<12x512xf32, #tpu.memory_space<vmem>>, %arg4: memref<4x512xf32, #tpu.memory_space<vmem>>, %arg5: memref<1x512xf32, #tpu.memory_space<vmem>>, %arg6: memref<256x256xf32, #tpu.memory_space<vmem>>, %arg7: memref<1x256xf32, #tpu.memory_space<vmem>>, %arg8: memref<256x256xf32, #tpu.memory_space<vmem>>, %arg9: memref<1x256xf32, #tpu.memory_space<vmem>>, %arg10: memref<256x128xf32, #tpu.memory_space<vmem>>, %arg11: memref<256x128xf32, #tpu.memory_space<vmem>>, %arg12: memref<1x2xf32, #tpu.memory_space<vmem>>, %arg13: memref<8x2xf32, #tpu.memory_space<vmem>>) attributes {dimension_semantics = [#tpu.dimension_semantics<parallel>], iteration_bounds = array<i64: 1>, scalar_prefetch = 0 : i64, scratch_operands = 0 : i64, tpu.core_type = #tpu.core_type<tc>, window_params = [{transform_indices = @transform_0, window_bounds = array<i64: 8, 12>}, {transform_indices = @transform_1, window_bounds = array<i64: 8, 4>}, {pipeline_mode = #tpu.pipeline_mode<synchronous>, transform_indices = @transform_2, window_bounds = array<i64: 12, 512>}, {pipeline_mode = #tpu.pipeline_mode<synchronous>, transform_indices = @transform_3, window_bounds = array<i64: 4, 512>}, {pipeline_mode = #tpu.pipeline_mode<synchronous>, transform_indices = @transform_4, window_bounds = array<i64: 1, 512>}, {pipeline_mode = #tpu.pipeline_mode<synchronous>, transform_indices = @transform_5, window_bounds = array<i64: 256, 256>}, {pipeline_mode = #tpu.pipeline_mode<synchronous>, transform_indices = @transform_6, window_bounds = array<i64: 1, 256>}, {pipeline_mode = #tpu.pipeline_mode<synchronous>, transform_indices = @transform_7, window_bounds = array<i64: 256, 256>}, {pipeline_mode = #tpu.pipeline_mode<synchronous>, transform_indices = @transform_8, window_bounds = array<i64: 1, 256>}, {pipeline_mode = #tpu.pipeline_mode<synchronous>, transform_indices = @transform_9, window_bounds = array<i64: 256, 128>}, {pipeline_mode = #tpu.pipeline_mode<synchronous>, transform_indices = @transform_10, window_bounds = array<i64: 256, 128>}, {pipeline_mode = #tpu.pipeline_mode<synchronous>, transform_indices = @transform_11, window_bounds = array<i64: 1, 2>}, {transform_indices = @transform_12, window_bounds = array<i64: 8, 2>}]} {
    %c0 = arith.constant 0 : index
    %c0_0 = arith.constant 0 : index
    %0 = vector.load %arg1[%c0, %c0_0] : memref<8x12xf32, #tpu.memory_space<vmem>>, vector<8x12xf32>
    %c0_1 = arith.constant 0 : index
    %c0_2 = arith.constant 0 : index
    %1 = vector.load %arg3[%c0_1, %c0_2] : memref<12x512xf32, #tpu.memory_space<vmem>>, vector<12x512xf32>
    %cst = arith.constant dense<0.000000e+00> : vector<8x512xf32>
    %2 = tpu.matmul %0, %1, %cst {dimension_numbers = #tpu.dot_dimension_numbers<[1], [0], [0], [1], [0, 0, 1, 1], [], []>} : vector<8x12xf32>, vector<12x512xf32>, vector<8x512xf32> -> vector<8x512xf32>
    %c0_3 = arith.constant 0 : index
    %c0_4 = arith.constant 0 : index
    %3 = vector.load %arg2[%c0_3, %c0_4] : memref<8x4xf32, #tpu.memory_space<vmem>>, vector<8x4xf32>
    %c0_5 = arith.constant 0 : index
    %c0_6 = arith.constant 0 : index
    %4 = vector.load %arg4[%c0_5, %c0_6] : memref<4x512xf32, #tpu.memory_space<vmem>>, vector<4x512xf32>
    %cst_7 = arith.constant dense<0.000000e+00> : vector<8x512xf32>
    %5 = tpu.matmul %3, %4, %cst_7 {dimension_numbers = #tpu.dot_dimension_numbers<[1], [0], [0], [1], [0, 0, 1, 1], [], []>} : vector<8x4xf32>, vector<4x512xf32>, vector<8x512xf32> -> vector<8x512xf32>
    %6 = arith.addf %2, %5 : vector<8x512xf32>
    %c0_8 = arith.constant 0 : index
    %c0_9 = arith.constant 0 : index
    %7 = vector.load %arg5[%c0_8, %c0_9] : memref<1x512xf32, #tpu.memory_space<vmem>>, vector<1x512xf32>
    %8 = vector.broadcast %7 : vector<1x512xf32> to vector<8x512xf32>
    %9 = arith.addf %6, %8 : vector<8x512xf32>
    %cst_10 = arith.constant 0.000000e+00 : f32
    %10 = vector.broadcast %cst_10 : f32 to vector<8x512xf32>
    %11 = arith.maximumf %9, %10 : vector<8x512xf32>
    %12 = vector.extract_strided_slice %11 {offsets = [0, 0], sizes = [8, 256], strides = [1, 1]} : vector<8x512xf32> to vector<8x256xf32>
    %13 = vector.extract_strided_slice %11 {offsets = [0, 256], sizes = [8, 256], strides = [1, 1]} : vector<8x512xf32> to vector<8x256xf32>
    %c0_11 = arith.constant 0 : index
    %c0_12 = arith.constant 0 : index
    %14 = vector.load %arg6[%c0_11, %c0_12] : memref<256x256xf32, #tpu.memory_space<vmem>>, vector<256x256xf32>
    %cst_13 = arith.constant dense<0.000000e+00> : vector<8x256xf32>
    %15 = tpu.matmul %12, %14, %cst_13 {dimension_numbers = #tpu.dot_dimension_numbers<[1], [0], [0], [1], [0, 0, 1, 1], [], []>} : vector<8x256xf32>, vector<256x256xf32>, vector<8x256xf32> -> vector<8x256xf32>
    %c0_14 = arith.constant 0 : index
    %c0_15 = arith.constant 0 : index
    %16 = vector.load %arg7[%c0_14, %c0_15] : memref<1x256xf32, #tpu.memory_space<vmem>>, vector<1x256xf32>
    %17 = vector.broadcast %16 : vector<1x256xf32> to vector<8x256xf32>
    %18 = arith.addf %15, %17 : vector<8x256xf32>
    %cst_16 = arith.constant 0.000000e+00 : f32
    %19 = vector.broadcast %cst_16 : f32 to vector<8x256xf32>
    %20 = arith.maximumf %18, %19 : vector<8x256xf32>
    %c0_17 = arith.constant 0 : index
    %c0_18 = arith.constant 0 : index
    %21 = vector.load %arg8[%c0_17, %c0_18] : memref<256x256xf32, #tpu.memory_space<vmem>>, vector<256x256xf32>
    %cst_19 = arith.constant dense<0.000000e+00> : vector<8x256xf32>
    %22 = tpu.matmul %13, %21, %cst_19 {dimension_numbers = #tpu.dot_dimension_numbers<[1], [0], [0], [1], [0, 0, 1, 1], [], []>} : vector<8x256xf32>, vector<256x256xf32>, vector<8x256xf32> -> vector<8x256xf32>
    %c0_20 = arith.constant 0 : index
    %c0_21 = arith.constant 0 : index
    %23 = vector.load %arg9[%c0_20, %c0_21] : memref<1x256xf32, #tpu.memory_space<vmem>>, vector<1x256xf32>
    %24 = vector.broadcast %23 : vector<1x256xf32> to vector<8x256xf32>
    %25 = arith.addf %22, %24 : vector<8x256xf32>
    %cst_22 = arith.constant 0.000000e+00 : f32
    %26 = vector.broadcast %cst_22 : f32 to vector<8x256xf32>
    %27 = arith.maximumf %25, %26 : vector<8x256xf32>
    %c0_23 = arith.constant 0 : index
    %c0_24 = arith.constant 0 : index
    %28 = vector.load %arg10[%c0_23, %c0_24] : memref<256x128xf32, #tpu.memory_space<vmem>>, vector<256x128xf32>
    %cst_25 = arith.constant dense<0.000000e+00> : vector<8x128xf32>
    %29 = tpu.matmul %20, %28, %cst_25 {dimension_numbers = #tpu.dot_dimension_numbers<[1], [0], [0], [1], [0, 0, 1, 1], [], []>} : vector<8x256xf32>, vector<256x128xf32>, vector<8x128xf32> -> vector<8x128xf32>
    %c0_26 = arith.constant 0 : index
    %c0_27 = arith.constant 0 : index
    %30 = vector.load %arg11[%c0_26, %c0_27] : memref<256x128xf32, #tpu.memory_space<vmem>>, vector<256x128xf32>
    %cst_28 = arith.constant dense<0.000000e+00> : vector<8x128xf32>
    %31 = tpu.matmul %27, %30, %cst_28 {dimension_numbers = #tpu.dot_dimension_numbers<[1], [0], [0], [1], [0, 0, 1, 1], [], []>} : vector<8x256xf32>, vector<256x128xf32>, vector<8x128xf32> -> vector<8x128xf32>
    %32 = arith.addf %29, %31 : vector<8x128xf32>
    %33 = vector.extract_strided_slice %32 {offsets = [0, 0], sizes = [8, 2], strides = [1, 1]} : vector<8x128xf32> to vector<8x2xf32>
    %c0_29 = arith.constant 0 : index
    %c0_30 = arith.constant 0 : index
    %34 = vector.load %arg12[%c0_29, %c0_30] : memref<1x2xf32, #tpu.memory_space<vmem>>, vector<1x2xf32>
    %35 = vector.broadcast %34 : vector<1x2xf32> to vector<8x2xf32>
    %36 = arith.addf %33, %35 : vector<8x2xf32>
    %c0_31 = arith.constant 0 : index
    %c0_32 = arith.constant 0 : index
    %37 = vector.load %arg13[%c0_31, %c0_32] : memref<8x2xf32, #tpu.memory_space<vmem>>, vector<8x2xf32>
    tpu.vector_store %arg13[%c0_31, %c0_32], %36 {strides = array<i32>} : memref<8x2xf32, #tpu.memory_space<vmem>>, vector<8x2xf32>,
    return
  }
  func.func @transform_0(%arg0: i32) -> (i32, i32) {
    %c0_i32 = arith.constant 0 : i32
    %c0_i32_0 = arith.constant 0 : i32
    return %arg0, %c0_i32 : i32, i32
  }
  func.func @transform_1(%arg0: i32) -> (i32, i32) {
    %c0_i32 = arith.constant 0 : i32
    %c0_i32_0 = arith.constant 0 : i32
    return %arg0, %c0_i32 : i32, i32
  }
  func.func @transform_2(%arg0: i32) -> (i32, i32) {
    %c0_i32 = arith.constant 0 : i32
    %c0_i32_0 = arith.constant 0 : i32
    %c0_i32_1 = arith.constant 0 : i32
    return %c0_i32, %c0_i32_0 : i32, i32
  }
  func.func @transform_3(%arg0: i32) -> (i32, i32) {
    %c0_i32 = arith.constant 0 : i32
    %c0_i32_0 = arith.constant 0 : i32
    %c0_i32_1 = arith.constant 0 : i32
    return %c0_i32, %c0_i32_0 : i32, i32
  }
  func.func @transform_4(%arg0: i32) -> (i32, i32) {
    %c0_i32 = arith.constant 0 : i32
    %c0_i32_0 = arith.constant 0 : i32
    %c0_i32_1 = arith.constant 0 : i32
    return %c0_i32, %c0_i32_0 : i32, i32
  }
  func.func @transform_5(%arg0: i32) -> (i32, i32) {
    %c0_i32 = arith.constant 0 : i32
    %c0_i32_0 = arith.constant 0 : i32
    %c0_i32_1 = arith.constant 0 : i32
    return %c0_i32, %c0_i32_0 : i32, i32
  }
  func.func @transform_6(%arg0: i32) -> (i32, i32) {
    %c0_i32 = arith.constant 0 : i32
    %c0_i32_0 = arith.constant 0 : i32
    %c0_i32_1 = arith.constant 0 : i32
    return %c0_i32, %c0_i32_0 : i32, i32
  }
  func.func @transform_7(%arg0: i32) -> (i32, i32) {
    %c0_i32 = arith.constant 0 : i32
    %c0_i32_0 = arith.constant 0 : i32
    %c0_i32_1 = arith.constant 0 : i32
    return %c0_i32, %c0_i32_0 : i32, i32
  }
  func.func @transform_8(%arg0: i32) -> (i32, i32) {
    %c0_i32 = arith.constant 0 : i32
    %c0_i32_0 = arith.constant 0 : i32
    %c0_i32_1 = arith.constant 0 : i32
    return %c0_i32, %c0_i32_0 : i32, i32
  }
  func.func @transform_9(%arg0: i32) -> (i32, i32) {
    %c0_i32 = arith.constant 0 : i32
    %c0_i32_0 = arith.constant 0 : i32
    %c0_i32_1 = arith.constant 0 : i32
    return %c0_i32, %c0_i32_0 : i32, i32
  }
  func.func @transform_10(%arg0: i32) -> (i32, i32) {
    %c0_i32 = arith.constant 0 : i32
    %c0_i32_0 = arith.constant 0 : i32
    %c0_i32_1 = arith.constant 0 : i32
    return %c0_i32, %c0_i32_0 : i32, i32
  }
  func.func @transform_11(%arg0: i32) -> (i32, i32) {
    %c0_i32 = arith.constant 0 : i32
    %c0_i32_0 = arith.constant 0 : i32
    %c0_i32_1 = arith.constant 0 : i32
    return %c0_i32, %c0_i32_0 : i32, i32
  }
  func.func @transform_12(%arg0: i32) -> (i32, i32) {
    %c0_i32 = arith.constant 0 : i32
    %c0_i32_0 = arith.constant 0 : i32
    return %arg0, %c0_i32 : i32, i32
  }
}

</mosaic_0001>

<llo_original>
// kernel: critic_td3_forward.1
$region0: #{critic_td3_forward.1}
  #allocation0 [shape = 'u32[]', space=smem, size = 0x4, offset = 0x4, fixed_abs, tag = 'smem constant byte address 0x4 - core index']
  #allocation1 [shape = 'u32[144,128]{1,0:T(1,128)}', space=vmem, size = 0x12000, scoped, tag = 'internal scratch']
  %s0 = inlined_call_operand.vmem [shape: f32[2,12], index: 0, kind: input, shape index: {}]
  %s1 = inlined_call_operand.vmem [shape: f32[2,4], index: 1, kind: input, shape index: {}]
  %s2 = inlined_call_operand.vmem [shape: f32[12,512], index: 2, kind: input, shape index: {}]
  %s3 = inlined_call_operand.vmem [shape: f32[4,512], index: 3, kind: input, shape index: {}]
  %s4 = inlined_call_operand.vmem [shape: f32[1,512], index: 4, kind: input, shape index: {}]
  %s5 = inlined_call_operand.vmem [shape: f32[256,256], index: 5, kind: input, shape index: {}]
  %s6 = inlined_call_operand.vmem [shape: f32[1,256], index: 6, kind: input, shape index: {}]
  %s7 = inlined_call_operand.vmem [shape: f32[256,256], index: 7, kind: input, shape index: {}]
  %s8 = inlined_call_operand.vmem [shape: f32[1,256], index: 8, kind: input, shape index: {}]
  %s9 = inlined_call_operand.vmem [shape: f32[256,128], index: 9, kind: input, shape index: {}]
  %s10 = inlined_call_operand.vmem [shape: f32[256,128], index: 10, kind: input, shape index: {}]
  %s11 = inlined_call_operand.vmem [shape: f32[1,2], index: 11, kind: input, shape index: {}]
  %s12 = inlined_call_operand.vmem [shape: f32[8,2], index: 12, kind: output, shape index: {}]
  %s13 = sld [smem:[#allocation0]]
  $region58: #{critic_td3_forward.1} parent=0
    _
  %s15 = ssub.s32 1, %s13
  %s16 = scalar_select 0, %s15, %s13
  // Predicated region
  $region2: #{critic_td3_forward.1} parent=0 // pred_check
    _
  $region3: #{critic_td3_forward.1} parent=0 // pred_check_branch
    %18 = sbr.rel (0) target = $region5
  $region4: #{critic_td3_forward.1} parent=0 // pred_region
    _
  $region5: #{critic_td3_forward.1} parent=0 // pred_fallthru
    _
  // Predicated region
  $region6: #{critic_td3_forward.1} parent=0 // pred_check
    _
  $region7: #{critic_td3_forward.1} parent=0 // pred_check_branch
    %20 = sbr.rel (0) target = $region9
  $region8: #{critic_td3_forward.1} parent=0 // pred_region
    _
  $region9: #{critic_td3_forward.1} parent=0 // pred_fallthru
    _
  // Predicated region
  $region10: #{critic_td3_forward.1} parent=0 // pred_check
    _
  $region11: #{critic_td3_forward.1} parent=0 // pred_check_branch
    %22 = sbr.rel (0) target = $region13
  $region12: #{critic_td3_forward.1} parent=0 // pred_region
    _
  $region13: #{critic_td3_forward.1} parent=0 // pred_fallthru
    _
  // Predicated region
  $region14: #{critic_td3_forward.1} parent=0 // pred_check
    _
  $region15: #{critic_td3_forward.1} parent=0 // pred_check_branch
    %24 = sbr.rel (0) target = $region17
  $region16: #{critic_td3_forward.1} parent=0 // pred_region
    _
  $region17: #{critic_td3_forward.1} parent=0 // pred_fallthru
    _
  // Predicated region
  $region18: #{critic_td3_forward.1} parent=0 // pred_check
    _
  $region19: #{critic_td3_forward.1} parent=0 // pred_check_branch
    %26 = sbr.rel (0) target = $region21
  $region20: #{critic_td3_forward.1} parent=0 // pred_region
    _
  $region21: #{critic_td3_forward.1} parent=0 // pred_fallthru
    _
  // Predicated region
  $region22: #{critic_td3_forward.1} parent=0 // pred_check
    _
  $region23: #{critic_td3_forward.1} parent=0 // pred_check_branch
    %28 = sbr.rel (0) target = $region25
  $region24: #{critic_td3_forward.1} parent=0 // pred_region
    _
  $region25: #{critic_td3_forward.1} parent=0 // pred_fallthru
    _
  // Predicated region
  $region26: #{critic_td3_forward.1} parent=0 // pred_check
    _
  $region27: #{critic_td3_forward.1} parent=0 // pred_check_branch
    %30 = sbr.rel (0) target = $region29
  $region28: #{critic_td3_forward.1} parent=0 // pred_region
    _
  $region29: #{critic_td3_forward.1} parent=0 // pred_fallthru
    _
  // Predicated region
  $region30: #{critic_td3_forward.1} parent=0 // pred_check
    _
  $region31: #{critic_td3_forward.1} parent=0 // pred_check_branch
    %32 = sbr.rel (0) target = $region33
  $region32: #{critic_td3_forward.1} parent=0 // pred_region
    _
  $region33: #{critic_td3_forward.1} parent=0 // pred_fallthru
    _
  // Predicated region
  $region34: #{critic_td3_forward.1} parent=0 // pred_check
    _
  $region35: #{critic_td3_forward.1} parent=0 // pred_check_branch
    %34 = sbr.rel (0) target = $region37
  $region36: #{critic_td3_forward.1} parent=0 // pred_region
    _
  $region37: #{critic_td3_forward.1} parent=0 // pred_fallthru
    _
  // Predicated region
  $region38: #{critic_td3_forward.1} parent=0 // pred_check
    _
  $region39: #{critic_td3_forward.1} parent=0 // pred_check_branch
    %36 = sbr.rel (0) target = $region41
  $region40: #{critic_td3_forward.1} parent=0 // pred_region
    _
  $region41: #{critic_td3_forward.1} parent=0 // pred_fallthru
    _
  // Predicated region
  $region42: #{critic_td3_forward.1} parent=0 // pred_check
    _
  $region43: #{critic_td3_forward.1} parent=0 // pred_check_branch
    %38 = sbr.rel (0) target = $region45
  $region44: #{critic_td3_forward.1} parent=0 // pred_region
    _
  $region45: #{critic_td3_forward.1} parent=0 // pred_fallthru
    _
  // Predicated region
  $region46: #{critic_td3_forward.1} parent=0 // pred_check
    _
  $region47: #{critic_td3_forward.1} parent=0 // pred_check_branch
    %40 = sbr.rel (0) target = $region49
  $region48: #{critic_td3_forward.1} parent=0 // pred_region
    _
  $region49: #{critic_td3_forward.1} parent=0 // pred_fallthru
    _
  %v41 = vld [vmem:[%s0] sm:$0xff]
  %v42 = vld [vmem:[%s2] sm:$0xff]
  %v43 = vld [vmem:[%s2 + $0x8] sm:$0xff]
  %v44 = vld [vmem:[%s2 + $0x10] sm:$0xff]
  %v45 = vld [vmem:[%s2 + $0x18] sm:$0xff]
  %v46 = vld [vmem:[%s2 + $0x20] sm:$0xf]
  %v47 = vld [vmem:[%s2 + $0x28] sm:$0xf]
  %v48 = vld [vmem:[%s2 + $0x30] sm:$0xf]
  %v49 = vld [vmem:[%s2 + $0x38] sm:$0xf]
  %v50 = vld [vmem:[%s1] sm:$0xff]
  %v51 = vld [vmem:[%s3] sm:$0xff]
  %v52 = vld [vmem:[%s3 + $0x8] sm:$0xff]
  %v55 = vcombine.high %v51, %v51
  %v56 = vcombine.high %v52, %v52
  %vm57 = vcmask 31744
  %v59 = vsel %vm57, %v50, 0
  %vm61 = vcmask 1043456
  %v62 = vsel %vm61, %v51, 0
  %v64 = vsel %vm61, %v55, 0
  %v66 = vsel %vm61, %v52, 0
  %v68 = vsel %vm61, %v56, 0
  %70 = vmatprep.subr.mxu0 %v64
  %71 = vmatpush1.msra.mxu0 %v62
  %72 = vmatprep.subr.mxu0 0.0
  %73 = vmatpush1.msra.mxu0 0.0
  %74 = vmatprep.subr.mxu0 0.0
  %75 = vmatpush1.msra.mxu0 0.0
  %76 = vmatprep.subr.mxu0 0.0
  %77 = vmatpush1.msra.mxu0 0.0
  %78 = vmatprep.subr.mxu0 0.0
  %79 = vmatpush1.msra.mxu0 0.0
  %80 = vmatprep.subr.mxu0 0.0
  %81 = vmatpush1.msra.mxu0 0.0
  %82 = vmatprep.subr.mxu0 0.0
  %83 = vmatpush1.msra.mxu0 0.0
  %84 = vmatprep.subr.mxu0 0.0
  %85 = vmatpush1.msra.mxu0 0.0
  %86 = vmatprep.subr.mxu0 0.0
  %87 = vmatpush1.msra.mxu0 0.0
  %88 = vmatprep.subr.mxu0 0.0
  %89 = vmatpush1.msra.mxu0 0.0
  %90 = vmatprep.subr.mxu0 0.0
  %91 = vmatpush1.msra.mxu0 0.0
  %92 = vmatprep.subr.mxu0 0.0
  %93 = vmatpush1.msra.mxu0 0.0
  %94 = vmatprep.subr.mxu0 0.0
  %95 = vmatpush1.msra.mxu0 0.0
  %96 = vmatprep.subr.mxu0 0.0
  %97 = vmatpush1.msra.mxu0 0.0
  %98 = vmatprep.subr.mxu0 0.0
  %99 = vmatpush1.msra.mxu0 0.0
  %100 = vmatprep.subr.mxu0 0.0
  %101 = vmatpush1.msra.mxu0 0.0
  %102 = vmatprep.subr.mxu0 0.0
  %103 = vmatpush1.msra.mxu0 0.0
  %104 = vmatprep.subr.mxu0 0.0
  %105 = vmatpush1.msra.mxu0 0.0
  %106 = vmatprep.subr.mxu0 0.0
  %107 = vmatpush1.msra.mxu0 0.0
  %108 = vmatprep.subr.mxu0 0.0
  %109 = vmatpush1.msra.mxu0 0.0
  %110 = vmatprep.subr.mxu0 0.0
  %111 = vmatpush1.msra.mxu0 0.0
  %112 = vmatprep.subr.mxu0 0.0
  %113 = vmatpush1.msra.mxu0 0.0
  %114 = vmatprep.subr.mxu0 0.0
  %115 = vmatpush1.msra.mxu0 0.0
  %116 = vmatprep.subr.mxu0 0.0
  %117 = vmatpush1.msra.mxu0 0.0
  %118 = vmatprep.subr.mxu0 0.0
  %119 = vmatpush1.msra.mxu0 0.0
  %120 = vmatprep.subr.mxu0 0.0
  %121 = vmatpush1.msra.mxu0 0.0
  %122 = vmatprep.subr.mxu0 0.0
  %123 = vmatpush1.msra.mxu0 0.0
  %124 = vmatprep.subr.mxu0 0.0
  %125 = vmatpush1.msra.mxu0 0.0
  %126 = vmatprep.subr.mxu0 0.0
  %127 = vmatpush1.msra.mxu0 0.0
  %128 = vmatprep.subr.mxu0 0.0
  %129 = vmatpush1.msra.mxu0 0.0
  %130 = vmatprep.subr.mxu0 0.0
  %131 = vmatpush1.msra.mxu0 0.0
  %132 = vmatprep.subr.mxu0 0.0
  %133 = vmatpush1.msra.mxu0 0.0
  %134 = vmatprep.mubr.f32.mxu0 0.0
  %135 = vmatmul.mubr.f32.gmra.mrb[0].mxu0 %v59
  %v136 = vpop.f32.mrb[0].mxu0
  %v137 = vadd.f32 0.0, %v136
  %v138 = vpop.f32.mrb[0].mxu0
  %v139 = vadd.f32 0.0, %v138
  %140 = vdwg.mxu0
  %141 = vmatprep.subr.mxu0 %v68
  %142 = vmatpush1.msra.mxu0 %v66
  %143 = vmatprep.subr.mxu0 0.0
  %144 = vmatpush1.msra.mxu0 0.0
  %145 = vmatprep.subr.mxu0 0.0
  %146 = vmatpush1.msra.mxu0 0.0
  %147 = vmatprep.subr.mxu0 0.0
  %148 = vmatpush1.msra.mxu0 0.0
  %149 = vmatprep.subr.mxu0 0.0
  %150 = vmatpush1.msra.mxu0 0.0
  %151 = vmatprep.subr.mxu0 0.0
  %152 = vmatpush1.msra.mxu0 0.0
  %153 = vmatprep.subr.mxu0 0.0
  %154 = vmatpush1.msra.mxu0 0.0
  %155 = vmatprep.subr.mxu0 0.0
  %156 = vmatpush1.msra.mxu0 0.0
  %157 = vmatprep.subr.mxu0 0.0
  %158 = vmatpush1.msra.mxu0 0.0
  %159 = vmatprep.subr.mxu0 0.0
  %160 = vmatpush1.msra.mxu0 0.0
  %161 = vmatprep.subr.mxu0 0.0
  %162 = vmatpush1.msra.mxu0 0.0
  %163 = vmatprep.subr.mxu0 0.0
  %164 = vmatpush1.msra.mxu0 0.0
  %165 = vmatprep.subr.mxu0 0.0
  %166 = vmatpush1.msra.mxu0 0.0
  %167 = vmatprep.subr.mxu0 0.0
  %168 = vmatpush1.msra.mxu0 0.0
  %169 = vmatprep.subr.mxu0 0.0
  %170 = vmatpush1.msra.mxu0 0.0
  %171 = vmatprep.subr.mxu0 0.0
  %172 = vmatpush1.msra.mxu0 0.0
  %173 = vmatprep.subr.mxu0 0.0
  %174 = vmatpush1.msra.mxu0 0.0
  %175 = vmatprep.subr.mxu0 0.0
  %176 = vmatpush1.msra.mxu0 0.0
  %177 = vmatprep.subr.mxu0 0.0
  %178 = vmatpush1.msra.mxu0 0.0
  %179 = vmatprep.subr.mxu0 0.0
  %180 = vmatpush1.msra.mxu0 0.0
  %181 = vmatprep.subr.mxu0 0.0
  %182 = vmatpush1.msra.mxu0 0.0
  %183 = vmatprep.subr.mxu0 0.0
  %184 = vmatpush1.msra.mxu0 0.0
  %185 = vmatprep.subr.mxu0 0.0
  %186 = vmatpush1.msra.mxu0 0.0
  %187 = vmatprep.subr.mxu0 0.0
  %188 = vmatpush1.msra.mxu0 0.0
  %189 = vmatprep.subr.mxu0 0.0
  %190 = vmatpush1.msra.mxu0 0.0
  %191 = vmatprep.subr.mxu0 0.0
  %192 = vmatpush1.msra.mxu0 0.0
  %193 = vmatprep.subr.mxu0 0.0
  %194 = vmatpush1.msra.mxu0 0.0
  %195 = vmatprep.subr.mxu0 0.0
  %196 = vmatpush1.msra.mxu0 0.0
  %197 = vmatprep.subr.mxu0 0.0
  %198 = vmatpush1.msra.mxu0 0.0
  %199 = vmatprep.subr.mxu0 0.0
  %200 = vmatpush1.msra.mxu0 0.0
  %201 = vmatprep.subr.mxu0 0.0
  %202 = vmatpush1.msra.mxu0 0.0
  %203 = vmatprep.subr.mxu0 0.0
  %204 = vmatpush1.msra.mxu0 0.0
  %205 = vmatprep.mubr.f32.mxu0 0.0
  %206 = vmatmul.mubr.f32.gmra.mrb[0].mxu0 %v59
  %v207 = vpop.f32.mrb[0].mxu0
  %v208 = vadd.f32 0.0, %v207
  %v209 = vpop.f32.mrb[0].mxu0
  %v210 = vadd.f32 0.0, %v209
  %211 = vdwg.mxu0
  %vm212 = vcmask 97280
  %v214 = vsel %vm212, %v41, 0
  %v217 = vsel %vm61, %v46, 0
  %v220 = vsel %vm61, %v47, 0
  %v223 = vsel %vm61, %v48, 0
  %v226 = vsel %vm61, %v49, 0
  %228 = vmatprep.subr.mxu0 %v43
  %229 = vmatpush1.msra.mxu0 %v42
  %230 = vmatprep.subr.mxu0 %v220
  %231 = vmatpush1.msra.mxu0 %v217
  %232 = vmatprep.subr.mxu0 0.0
  %233 = vmatpush1.msra.mxu0 0.0
  %234 = vmatprep.subr.mxu0 0.0
  %235 = vmatpush1.msra.mxu0 0.0
  %236 = vmatprep.subr.mxu0 0.0
  %237 = vmatpush1.msra.mxu0 0.0
  %238 = vmatprep.subr.mxu0 0.0
  %239 = vmatpush1.msra.mxu0 0.0
  %240 = vmatprep.subr.mxu0 0.0
  %241 = vmatpush1.msra.mxu0 0.0
  %242 = vmatprep.subr.mxu0 0.0
  %243 = vmatpush1.msra.mxu0 0.0
  %244 = vmatprep.subr.mxu0 0.0
  %245 = vmatpush1.msra.mxu0 0.0
  %246 = vmatprep.subr.mxu0 0.0
  %247 = vmatpush1.msra.mxu0 0.0
  %248 = vmatprep.subr.mxu0 0.0
  %249 = vmatpush1.msra.mxu0 0.0
  %250 = vmatprep.subr.mxu0 0.0
  %251 = vmatpush1.msra.mxu0 0.0
  %252 = vmatprep.subr.mxu0 0.0
  %253 = vmatpush1.msra.mxu0 0.0
  %254 = vmatprep.subr.mxu0 0.0
  %255 = vmatpush1.msra.mxu0 0.0
  %256 = vmatprep.subr.mxu0 0.0
  %257 = vmatpush1.msra.mxu0 0.0
  %258 = vmatprep.subr.mxu0 0.0
  %259 = vmatpush1.msra.mxu0 0.0
  %260 = vmatprep.subr.mxu0 0.0
  %261 = vmatpush1.msra.mxu0 0.0
  %262 = vmatprep.subr.mxu0 0.0
  %263 = vmatpush1.msra.mxu0 0.0
  %264 = vmatprep.subr.mxu0 0.0
  %265 = vmatpush1.msra.mxu0 0.0
  %266 = vmatprep.subr.mxu0 0.0
  %267 = vmatpush1.msra.mxu0 0.0
  %268 = vmatprep.subr.mxu0 0.0
  %269 = vmatpush1.msra.mxu0 0.0
  %270 = vmatprep.subr.mxu0 0.0
  %271 = vmatpush1.msra.mxu0 0.0
  %272 = vmatprep.subr.mxu0 0.0
  %273 = vmatpush1.msra.mxu0 0.0
  %274 = vmatprep.subr.mxu0 0.0
  %275 = vmatpush1.msra.mxu0 0.0
  %276 = vmatprep.subr.mxu0 0.0
  %277 = vmatpush1.msra.mxu0 0.0
  %278 = vmatprep.subr.mxu0 0.0
  %279 = vmatpush1.msra.mxu0 0.0
  %280 = vmatprep.subr.mxu0 0.0
  %281 = vmatpush1.msra.mxu0 0.0
  %282 = vmatprep.subr.mxu0 0.0
  %283 = vmatpush1.msra.mxu0 0.0
  %284 = vmatprep.subr.mxu0 0.0
  %285 = vmatpush1.msra.mxu0 0.0
  %286 = vmatprep.subr.mxu0 0.0
  %287 = vmatpush1.msra.mxu0 0.0
  %288 = vmatprep.subr.mxu0 0.0
  %289 = vmatpush1.msra.mxu0 0.0
  %290 = vmatprep.subr.mxu0 0.0
  %291 = vmatpush1.msra.mxu0 0.0
  %292 = vmatprep.mubr.f32.mxu0 0.0
  %293 = vmatmul.mubr.f32.gmra.mrb[0].mxu0 %v214
  %v294 = vpop.f32.mrb[0].mxu0
  %v295 = vadd.f32 %v137, %v294
  %v296 = vpop.f32.mrb[0].mxu0
  %v297 = vadd.f32 %v139, %v296
  %298 = vdwg.mxu0
  %299 = vmatprep.subr.mxu0 %v45
  %300 = vmatpush1.msra.mxu0 %v44
  %301 = vmatprep.subr.mxu0 %v226
  %302 = vmatpush1.msra.mxu0 %v223
  %303 = vmatprep.subr.mxu0 0.0
  %304 = vmatpush1.msra.mxu0 0.0
  %305 = vmatprep.subr.mxu0 0.0
  %306 = vmatpush1.msra.mxu0 0.0
  %307 = vmatprep.subr.mxu0 0.0
  %308 = vmatpush1.msra.mxu0 0.0
  %309 = vmatprep.subr.mxu0 0.0
  %310 = vmatpush1.msra.mxu0 0.0
  %311 = vmatprep.subr.mxu0 0.0
  %312 = vmatpush1.msra.mxu0 0.0
  %313 = vmatprep.subr.mxu0 0.0
  %314 = vmatpush1.msra.mxu0 0.0
  %315 = vmatprep.subr.mxu0 0.0
  %316 = vmatpush1.msra.mxu0 0.0
  %317 = vmatprep.subr.mxu0 0.0
  %318 = vmatpush1.msra.mxu0 0.0
  %319 = vmatprep.subr.mxu0 0.0
  %320 = vmatpush1.msra.mxu0 0.0
  %321 = vmatprep.subr.mxu0 0.0
  %322 = vmatpush1.msra.mxu0 0.0
  %323 = vmatprep.subr.mxu0 0.0
  %324 = vmatpush1.msra.mxu0 0.0
  %325 = vmatprep.subr.mxu0 0.0
  %326 = vmatpush1.msra.mxu0 0.0
  %327 = vmatprep.subr.mxu0 0.0
  %328 = vmatpush1.msra.mxu0 0.0
  %329 = vmatprep.subr.mxu0 0.0
  %330 = vmatpush1.msra.mxu0 0.0
  %331 = vmatprep.subr.mxu0 0.0
  %332 = vmatpush1.msra.mxu0 0.0
  %333 = vmatprep.subr.mxu0 0.0
  %334 = vmatpush1.msra.mxu0 0.0
  %335 = vmatprep.subr.mxu0 0.0
  %336 = vmatpush1.msra.mxu0 0.0
  %337 = vmatprep.subr.mxu0 0.0
  %338 = vmatpush1.msra.mxu0 0.0
  %339 = vmatprep.subr.mxu0 0.0
  %340 = vmatpush1.msra.mxu0 0.0
  %341 = vmatprep.subr.mxu0 0.0
  %342 = vmatpush1.msra.mxu0 0.0
  %343 = vmatprep.subr.mxu0 0.0
  %344 = vmatpush1.msra.mxu0 0.0
  %345 = vmatprep.subr.mxu0 0.0
  %346 = vmatpush1.msra.mxu0 0.0
  %347 = vmatprep.subr.mxu0 0.0
  %348 = vmatpush1.msra.mxu0 0.0
  %349 = vmatprep.subr.mxu0 0.0
  %350 = vmatpush1.msra.mxu0 0.0
  %351 = vmatprep.subr.mxu0 0.0
  %352 = vmatpush1.msra.mxu0 0.0
  %353 = vmatprep.subr.mxu0 0.0
  %354 = vmatpush1.msra.mxu0 0.0
  %355 = vmatprep.subr.mxu0 0.0
  %356 = vmatpush1.msra.mxu0 0.0
  %357 = vmatprep.subr.mxu0 0.0
  %358 = vmatpush1.msra.mxu0 0.0
  %359 = vmatprep.subr.mxu0 0.0
  %360 = vmatpush1.msra.mxu0 0.0
  %361 = vmatprep.subr.mxu0 0.0
  %362 = vmatpush1.msra.mxu0 0.0
  %363 = vmatprep.mubr.f32.mxu0 0.0
  %364 = vmatmul.mubr.f32.gmra.mrb[0].mxu0 %v214
  %v365 = vpop.f32.mrb[0].mxu0
  %v366 = vadd.f32 %v208, %v365
  %v367 = vpop.f32.mrb[0].mxu0
  %v368 = vadd.f32 %v210, %v367
  %369 = vdwg.mxu0
  %v370 = vld [vmem:[%s4] sm:$0xf]
  %v372 = vlaneseq
  %v373 = vshrl.u32 %v372, 7
  %v374 = vsub.s32 0, %v373
  %v375 = vrot.slane %v370, %v374
  %v376 = vlaneseq
  %v377 = vshrl.u32 %v376, 7
  %v378 = vsub.s32 1, %v377
  %v379 = vrot.slane %v370, %v378
  %v380 = vlaneseq
  %v381 = vshrl.u32 %v380, 7
  %v382 = vsub.s32 2, %v381
  %v383 = vrot.slane %v370, %v382
  %v384 = vlaneseq
  %v385 = vshrl.u32 %v384, 7
  %v386 = vsub.s32 3, %v385
  %v387 = vrot.slane %v370, %v386
  %v392 = vadd.f32 %v295, %v375
  %v393 = vadd.f32 %v297, %v379
  %v394 = vadd.f32 %v366, %v383
  %v395 = vadd.f32 %v368, %v387
  %v396 = vmax.f32 %v392, 0.0
  %v397 = vmax.f32 %v393, 0.0
  %v398 = vmax.f32 %v394, 0.0
  %v399 = vmax.f32 %v395, 0.0
  %v400 = vld [vmem:[%s5] sm:$0xff]
  %v401 = vld [vmem:[%s5 + $0x8] sm:$0xff]
  %v402 = vld [vmem:[%s5 + $0x10] sm:$0xff]
  %v403 = vld [vmem:[%s5 + $0x18] sm:$0xff]
  %v404 = vld [vmem:[%s5 + $0x20] sm:$0xff]
  %v405 = vld [vmem:[%s5 + $0x28] sm:$0xff]
  %v406 = vld [vmem:[%s5 + $0x30] sm:$0xff]
  %v407 = vld [vmem:[%s5 + $0x38] sm:$0xff]
  %v408 = vld [vmem:[%s5 + $0x40] sm:$0xff]
  %v409 = vld [vmem:[%s5 + $0x48] sm:$0xff]
  %v410 = vld [vmem:[%s5 + $0x50] sm:$0xff]
  %v411 = vld [vmem:[%s5 + $0x58] sm:$0xff]
  %v412 = vld [vmem:[%s5 + $0x60] sm:$0xff]
  %v413 = vld [vmem:[%s5 + $0x68] sm:$0xff]
  %v414 = vld [vmem:[%s5 + $0x70] sm:$0xff]
  %v415 = vld [vmem:[%s5 + $0x78] sm:$0xff]
  %v416 = vld [vmem:[%s5 + $0x80] sm:$0xff]
  %v417 = vld [vmem:[%s5 + $0x88] sm:$0xff]
  %v418 = vld [vmem:[%s5 + $0x90] sm:$0xff]
  %v419 = vld [vmem:[%s5 + $0x98] sm:$0xff]
  %v420 = vld [vmem:[%s5 + $0xa0] sm:$0xff]
  %v421 = vld [vmem:[%s5 + $0xa8] sm:$0xff]
  %v422 = vld [vmem:[%s5 + $0xb0] sm:$0xff]
  %v423 = vld [vmem:[%s5 + $0xb8] sm:$0xff]
  %v424 = vld [vmem:[%s5 + $0xc0] sm:$0xff]
  %v425 = vld [vmem:[%s5 + $0xc8] sm:$0xff]
  %v426 = vld [vmem:[%s5 + $0xd0] sm:$0xff]
  %v427 = vld [vmem:[%s5 + $0xd8] sm:$0xff]
  %v428 = vld [vmem:[%s5 + $0xe0] sm:$0xff]
  %v429 = vld [vmem:[%s5 + $0xe8] sm:$0xff]
  %v430 = vld [vmem:[%s5 + $0xf0] sm:$0xff]
  %v431 = vld [vmem:[%s5 + $0xf8] sm:$0xff]
  %v432 = vld [vmem:[%s5 + $0x100] sm:$0xff]
  %v433 = vld [vmem:[%s5 + $0x108] sm:$0xff]
  %v434 = vld [vmem:[%s5 + $0x110] sm:$0xff]
  %v435 = vld [vmem:[%s5 + $0x118] sm:$0xff]
  %v436 = vld [vmem:[%s5 + $0x120] sm:$0xff]
  %v437 = vld [vmem:[%s5 + $0x128] sm:$0xff]
  %v438 = vld [vmem:[%s5 + $0x130] sm:$0xff]
  %v439 = vld [vmem:[%s5 + $0x138] sm:$0xff]
  %v440 = vld [vmem:[%s5 + $0x140] sm:$0xff]
  %v441 = vld [vmem:[%s5 + $0x148] sm:$0xff]
  %v442 = vld [vmem:[%s5 + $0x150] sm:$0xff]
  %v443 = vld [vmem:[%s5 + $0x158] sm:$0xff]
  %v444 = vld [vmem:[%s5 + $0x160] sm:$0xff]
  %v445 = vld [vmem:[%s5 + $0x168] sm:$0xff]
  %v446 = vld [vmem:[%s5 + $0x170] sm:$0xff]
  %v447 = vld [vmem:[%s5 + $0x178] sm:$0xff]
  %v448 = vld [vmem:[%s5 + $0x180] sm:$0xff]
  %v449 = vld [vmem:[%s5 + $0x188] sm:$0xff]
  %v450 = vld [vmem:[%s5 + $0x190] sm:$0xff]
  %v451 = vld [vmem:[%s5 + $0x198] sm:$0xff]
  %v452 = vld [vmem:[%s5 + $0x1a0] sm:$0xff]
  %v453 = vld [vmem:[%s5 + $0x1a8] sm:$0xff]
  %v454 = vld [vmem:[%s5 + $0x1b0] sm:$0xff]
  %v455 = vld [vmem:[%s5 + $0x1b8] sm:$0xff]
  %v456 = vld [vmem:[%s5 + $0x1c0] sm:$0xff]
  %v457 = vld [vmem:[%s5 + $0x1c8] sm:$0xff]
  %v458 = vld [vmem:[%s5 + $0x1d0] sm:$0xff]
  %v459 = vld [vmem:[%s5 + $0x1d8] sm:$0xff]
  %v460 = vld [vmem:[%s5 + $0x1e0] sm:$0xff]
  %v461 = vld [vmem:[%s5 + $0x1e8] sm:$0xff]
  %v462 = vld [vmem:[%s5 + $0x1f0] sm:$0xff]
  %v463 = vld [vmem:[%s5 + $0x1f8] sm:$0xff]
  %v464 = vld [vmem:[%s6] sm:$0x3]
  %v466 = vlaneseq
  %v467 = vshrl.u32 %v466, 7
  %v468 = vsub.s32 0, %v467
  %v469 = vrot.slane %v464, %v468
  %v470 = vlaneseq
  %v471 = vshrl.u32 %v470, 7
  %v472 = vsub.s32 1, %v471
  %v473 = vrot.slane %v464, %v472
  %476 = vmatprep.subr.mxu0 %v401
  %477 = vmatpush1.msra.mxu0 %v400
  %478 = vmatprep.subr.mxu0 %v403
  %479 = vmatpush1.msra.mxu0 %v402
  %480 = vmatprep.subr.mxu0 %v405
  %481 = vmatpush1.msra.mxu0 %v404
  %482 = vmatprep.subr.mxu0 %v407
  %483 = vmatpush1.msra.mxu0 %v406
  %484 = vmatprep.subr.mxu0 %v409
  %485 = vmatpush1.msra.mxu0 %v408
  %486 = vmatprep.subr.mxu0 %v411
  %487 = vmatpush1.msra.mxu0 %v410
  %488 = vmatprep.subr.mxu0 %v413
  %489 = vmatpush1.msra.mxu0 %v412
  %490 = vmatprep.subr.mxu0 %v415
  %491 = vmatpush1.msra.mxu0 %v414
  %492 = vmatprep.subr.mxu0 %v417
  %493 = vmatpush1.msra.mxu0 %v416
  %494 = vmatprep.subr.mxu0 %v419
  %495 = vmatpush1.msra.mxu0 %v418
  %496 = vmatprep.subr.mxu0 %v421
  %497 = vmatpush1.msra.mxu0 %v420
  %498 = vmatprep.subr.mxu0 %v423
  %499 = vmatpush1.msra.mxu0 %v422
  %500 = vmatprep.subr.mxu0 %v425
  %501 = vmatpush1.msra.mxu0 %v424
  %502 = vmatprep.subr.mxu0 %v427
  %503 = vmatpush1.msra.mxu0 %v426
  %504 = vmatprep.subr.mxu0 %v429
  %505 = vmatpush1.msra.mxu0 %v428
  %506 = vmatprep.subr.mxu0 %v431
  %507 = vmatpush1.msra.mxu0 %v430
  %508 = vmatprep.subr.mxu0 %v433
  %509 = vmatpush1.msra.mxu0 %v432
  %510 = vmatprep.subr.mxu0 %v435
  %511 = vmatpush1.msra.mxu0 %v434
  %512 = vmatprep.subr.mxu0 %v437
  %513 = vmatpush1.msra.mxu0 %v436
  %514 = vmatprep.subr.mxu0 %v439
  %515 = vmatpush1.msra.mxu0 %v438
  %516 = vmatprep.subr.mxu0 %v441
  %517 = vmatpush1.msra.mxu0 %v440
  %518 = vmatprep.subr.mxu0 %v443
  %519 = vmatpush1.msra.mxu0 %v442
  %520 = vmatprep.subr.mxu0 %v445
  %521 = vmatpush1.msra.mxu0 %v444
  %522 = vmatprep.subr.mxu0 %v447
  %523 = vmatpush1.msra.mxu0 %v446
  %524 = vmatprep.subr.mxu0 %v449
  %525 = vmatpush1.msra.mxu0 %v448
  %526 = vmatprep.subr.mxu0 %v451
  %527 = vmatpush1.msra.mxu0 %v450
  %528 = vmatprep.subr.mxu0 %v453
  %529 = vmatpush1.msra.mxu0 %v452
  %530 = vmatprep.subr.mxu0 %v455
  %531 = vmatpush1.msra.mxu0 %v454
  %532 = vmatprep.subr.mxu0 %v457
  %533 = vmatpush1.msra.mxu0 %v456
  %534 = vmatprep.subr.mxu0 %v459
  %535 = vmatpush1.msra.mxu0 %v458
  %536 = vmatprep.subr.mxu0 %v461
  %537 = vmatpush1.msra.mxu0 %v460
  %538 = vmatprep.subr.mxu0 %v463
  %539 = vmatpush1.msra.mxu0 %v462
  %540 = vmatprep.mubr.f32.mxu0 %v397
  %541 = vmatmul.mubr.f32.gmra.mrb[0].mxu0 %v396
  %v542 = vpop.f32.mrb[0].mxu0
  %v543 = vadd.f32 %v469, %v542
  %v544 = vpop.f32.mrb[0].mxu0
  %v545 = vadd.f32 %v473, %v544
  %546 = vdwg.mxu0
  %v547 = vmax.f32 %v543, 0.0
  %v548 = vmax.f32 %v545, 0.0
  %v549 = vld [vmem:[%s7] sm:$0xff]
  %v550 = vld [vmem:[%s7 + $0x8] sm:$0xff]
  %v551 = vld [vmem:[%s7 + $0x10] sm:$0xff]
  %v552 = vld [vmem:[%s7 + $0x18] sm:$0xff]
  %v553 = vld [vmem:[%s7 + $0x20] sm:$0xff]
  %v554 = vld [vmem:[%s7 + $0x28] sm:$0xff]
  %v555 = vld [vmem:[%s7 + $0x30] sm:$0xff]
  %v556 = vld [vmem:[%s7 + $0x38] sm:$0xff]
  %v557 = vld [vmem:[%s7 + $0x40] sm:$0xff]
  %v558 = vld [vmem:[%s7 + $0x48] sm:$0xff]
  %v559 = vld [vmem:[%s7 + $0x50] sm:$0xff]
  %v560 = vld [vmem:[%s7 + $0x58] sm:$0xff]
  %v561 = vld [vmem:[%s7 + $0x60] sm:$0xff]
  %v562 = vld [vmem:[%s7 + $0x68] sm:$0xff]
  %v563 = vld [vmem:[%s7 + $0x70] sm:$0xff]
  %v564 = vld [vmem:[%s7 + $0x78] sm:$0xff]
  %v565 = vld [vmem:[%s7 + $0x80] sm:$0xff]
  %v566 = vld [vmem:[%s7 + $0x88] sm:$0xff]
  %v567 = vld [vmem:[%s7 + $0x90] sm:$0xff]
  %v568 = vld [vmem:[%s7 + $0x98] sm:$0xff]
  %v569 = vld [vmem:[%s7 + $0xa0] sm:$0xff]
  %v570 = vld [vmem:[%s7 + $0xa8] sm:$0xff]
  %v571 = vld [vmem:[%s7 + $0xb0] sm:$0xff]
  %v572 = vld [vmem:[%s7 + $0xb8] sm:$0xff]
  %v573 = vld [vmem:[%s7 + $0xc0] sm:$0xff]
  %v574 = vld [vmem:[%s7 + $0xc8] sm:$0xff]
  %v575 = vld [vmem:[%s7 + $0xd0] sm:$0xff]
  %v576 = vld [vmem:[%s7 + $0xd8] sm:$0xff]
  %v577 = vld [vmem:[%s7 + $0xe0] sm:$0xff]
  %v578 = vld [vmem:[%s7 + $0xe8] sm:$0xff]
  %v579 = vld [vmem:[%s7 + $0xf0] sm:$0xff]
  %v580 = vld [vmem:[%s7 + $0xf8] sm:$0xff]
  %v581 = vld [vmem:[%s7 + $0x100] sm:$0xff]
  %v582 = vld [vmem:[%s7 + $0x108] sm:$0xff]
  %v583 = vld [vmem:[%s7 + $0x110] sm:$0xff]
  %v584 = vld [vmem:[%s7 + $0x118] sm:$0xff]
  %v585 = vld [vmem:[%s7 + $0x120] sm:$0xff]
  %v586 = vld [vmem:[%s7 + $0x128] sm:$0xff]
  %v587 = vld [vmem:[%s7 + $0x130] sm:$0xff]
  %v588 = vld [vmem:[%s7 + $0x138] sm:$0xff]
  %v589 = vld [vmem:[%s7 + $0x140] sm:$0xff]
  %v590 = vld [vmem:[%s7 + $0x148] sm:$0xff]
  %v591 = vld [vmem:[%s7 + $0x150] sm:$0xff]
  %v592 = vld [vmem:[%s7 + $0x158] sm:$0xff]
  %v593 = vld [vmem:[%s7 + $0x160] sm:$0xff]
  %v594 = vld [vmem:[%s7 + $0x168] sm:$0xff]
  %v595 = vld [vmem:[%s7 + $0x170] sm:$0xff]
  %v596 = vld [vmem:[%s7 + $0x178] sm:$0xff]
  %v597 = vld [vmem:[%s7 + $0x180] sm:$0xff]
  %v598 = vld [vmem:[%s7 + $0x188] sm:$0xff]
  %v599 = vld [vmem:[%s7 + $0x190] sm:$0xff]
  %v600 = vld [vmem:[%s7 + $0x198] sm:$0xff]
  %v601 = vld [vmem:[%s7 + $0x1a0] sm:$0xff]
  %v602 = vld [vmem:[%s7 + $0x1a8] sm:$0xff]
  %v603 = vld [vmem:[%s7 + $0x1b0] sm:$0xff]
  %v604 = vld [vmem:[%s7 + $0x1b8] sm:$0xff]
  %v605 = vld [vmem:[%s7 + $0x1c0] sm:$0xff]
  %v606 = vld [vmem:[%s7 + $0x1c8] sm:$0xff]
  %v607 = vld [vmem:[%s7 + $0x1d0] sm:$0xff]
  %v608 = vld [vmem:[%s7 + $0x1d8] sm:$0xff]
  %v609 = vld [vmem:[%s7 + $0x1e0] sm:$0xff]
  %v610 = vld [vmem:[%s7 + $0x1e8] sm:$0xff]
  %v611 = vld [vmem:[%s7 + $0x1f0] sm:$0xff]
  %v612 = vld [vmem:[%s7 + $0x1f8] sm:$0xff]
  %v613 = vld [vmem:[%s8] sm:$0x3]
  %v615 = vlaneseq
  %v616 = vshrl.u32 %v615, 7
  %v617 = vsub.s32 0, %v616
  %v618 = vrot.slane %v613, %v617
  %v619 = vlaneseq
  %v620 = vshrl.u32 %v619, 7
  %v621 = vsub.s32 1, %v620
  %v622 = vrot.slane %v613, %v621
  %625 = vmatprep.subr.mxu0 %v550
  %626 = vmatpush1.msra.mxu0 %v549
  %627 = vmatprep.subr.mxu0 %v552
  %628 = vmatpush1.msra.mxu0 %v551
  %629 = vmatprep.subr.mxu0 %v554
  %630 = vmatpush1.msra.mxu0 %v553
  %631 = vmatprep.subr.mxu0 %v556
  %632 = vmatpush1.msra.mxu0 %v555
  %633 = vmatprep.subr.mxu0 %v558
  %634 = vmatpush1.msra.mxu0 %v557
  %635 = vmatprep.subr.mxu0 %v560
  %636 = vmatpush1.msra.mxu0 %v559
  %637 = vmatprep.subr.mxu0 %v562
  %638 = vmatpush1.msra.mxu0 %v561
  %639 = vmatprep.subr.mxu0 %v564
  %640 = vmatpush1.msra.mxu0 %v563
  %641 = vmatprep.subr.mxu0 %v566
  %642 = vmatpush1.msra.mxu0 %v565
  %643 = vmatprep.subr.mxu0 %v568
  %644 = vmatpush1.msra.mxu0 %v567
  %645 = vmatprep.subr.mxu0 %v570
  %646 = vmatpush1.msra.mxu0 %v569
  %647 = vmatprep.subr.mxu0 %v572
  %648 = vmatpush1.msra.mxu0 %v571
  %649 = vmatprep.subr.mxu0 %v574
  %650 = vmatpush1.msra.mxu0 %v573
  %651 = vmatprep.subr.mxu0 %v576
  %652 = vmatpush1.msra.mxu0 %v575
  %653 = vmatprep.subr.mxu0 %v578
  %654 = vmatpush1.msra.mxu0 %v577
  %655 = vmatprep.subr.mxu0 %v580
  %656 = vmatpush1.msra.mxu0 %v579
  %657 = vmatprep.subr.mxu0 %v582
  %658 = vmatpush1.msra.mxu0 %v581
  %659 = vmatprep.subr.mxu0 %v584
  %660 = vmatpush1.msra.mxu0 %v583
  %661 = vmatprep.subr.mxu0 %v586
  %662 = vmatpush1.msra.mxu0 %v585
  %663 = vmatprep.subr.mxu0 %v588
  %664 = vmatpush1.msra.mxu0 %v587
  %665 = vmatprep.subr.mxu0 %v590
  %666 = vmatpush1.msra.mxu0 %v589
  %667 = vmatprep.subr.mxu0 %v592
  %668 = vmatpush1.msra.mxu0 %v591
  %669 = vmatprep.subr.mxu0 %v594
  %670 = vmatpush1.msra.mxu0 %v593
  %671 = vmatprep.subr.mxu0 %v596
  %672 = vmatpush1.msra.mxu0 %v595
  %673 = vmatprep.subr.mxu0 %v598
  %674 = vmatpush1.msra.mxu0 %v597
  %675 = vmatprep.subr.mxu0 %v600
  %676 = vmatpush1.msra.mxu0 %v599
  %677 = vmatprep.subr.mxu0 %v602
  %678 = vmatpush1.msra.mxu0 %v601
  %679 = vmatprep.subr.mxu0 %v604
  %680 = vmatpush1.msra.mxu0 %v603
  %681 = vmatprep.subr.mxu0 %v606
  %682 = vmatpush1.msra.mxu0 %v605
  %683 = vmatprep.subr.mxu0 %v608
  %684 = vmatpush1.msra.mxu0 %v607
  %685 = vmatprep.subr.mxu0 %v610
  %686 = vmatpush1.msra.mxu0 %v609
  %687 = vmatprep.subr.mxu0 %v612
  %688 = vmatpush1.msra.mxu0 %v611
  %689 = vmatprep.mubr.f32.mxu0 %v399
  %690 = vmatmul.mubr.f32.gmra.mrb[0].mxu0 %v398
  %v691 = vpop.f32.mrb[0].mxu0
  %v692 = vadd.f32 %v618, %v691
  %v693 = vpop.f32.mrb[0].mxu0
  %v694 = vadd.f32 %v622, %v693
  %695 = vdwg.mxu0
  %v696 = vmax.f32 %v692, 0.0
  %v697 = vmax.f32 %v694, 0.0
  %v698 = vld [vmem:[%s9] sm:$0xff]
  %v699 = vld [vmem:[%s9 + $0x8] sm:$0xff]
  %v700 = vld [vmem:[%s9 + $0x10] sm:$0xff]
  %v701 = vld [vmem:[%s9 + $0x18] sm:$0xff]
  %v702 = vld [vmem:[%s9 + $0x20] sm:$0xff]
  %v703 = vld [vmem:[%s9 + $0x28] sm:$0xff]
  %v704 = vld [vmem:[%s9 + $0x30] sm:$0xff]
  %v705 = vld [vmem:[%s9 + $0x38] sm:$0xff]
  %v706 = vld [vmem:[%s9 + $0x40] sm:$0xff]
  %v707 = vld [vmem:[%s9 + $0x48] sm:$0xff]
  %v708 = vld [vmem:[%s9 + $0x50] sm:$0xff]
  %v709 = vld [vmem:[%s9 + $0x58] sm:$0xff]
  %v710 = vld [vmem:[%s9 + $0x60] sm:$0xff]
  %v711 = vld [vmem:[%s9 + $0x68] sm:$0xff]
  %v712 = vld [vmem:[%s9 + $0x70] sm:$0xff]
  %v713 = vld [vmem:[%s9 + $0x78] sm:$0xff]
  %v714 = vld [vmem:[%s9 + $0x80] sm:$0xff]
  %v715 = vld [vmem:[%s9 + $0x88] sm:$0xff]
  %v716 = vld [vmem:[%s9 + $0x90] sm:$0xff]
  %v717 = vld [vmem:[%s9 + $0x98] sm:$0xff]
  %v718 = vld [vmem:[%s9 + $0xa0] sm:$0xff]
  %v719 = vld [vmem:[%s9 + $0xa8] sm:$0xff]
  %v720 = vld [vmem:[%s9 + $0xb0] sm:$0xff]
  %v721 = vld [vmem:[%s9 + $0xb8] sm:$0xff]
  %v722 = vld [vmem:[%s9 + $0xc0] sm:$0xff]
  %v723 = vld [vmem:[%s9 + $0xc8] sm:$0xff]
  %v724 = vld [vmem:[%s9 + $0xd0] sm:$0xff]
  %v725 = vld [vmem:[%s9 + $0xd8] sm:$0xff]
  %v726 = vld [vmem:[%s9 + $0xe0] sm:$0xff]
  %v727 = vld [vmem:[%s9 + $0xe8] sm:$0xff]
  %v728 = vld [vmem:[%s9 + $0xf0] sm:$0xff]
  %v729 = vld [vmem:[%s9 + $0xf8] sm:$0xff]
  %v730 = vld [vmem:[%s10] sm:$0xff]
  %v731 = vld [vmem:[%s10 + $0x8] sm:$0xff]
  %v732 = vld [vmem:[%s10 + $0x10] sm:$0xff]
  %v733 = vld [vmem:[%s10 + $0x18] sm:$0xff]
  %v734 = vld [vmem:[%s10 + $0x20] sm:$0xff]
  %v735 = vld [vmem:[%s10 + $0x28] sm:$0xff]
  %v736 = vld [vmem:[%s10 + $0x30] sm:$0xff]
  %v737 = vld [vmem:[%s10 + $0x38] sm:$0xff]
  %v738 = vld [vmem:[%s10 + $0x40] sm:$0xff]
  %v739 = vld [vmem:[%s10 + $0x48] sm:$0xff]
  %v740 = vld [vmem:[%s10 + $0x50] sm:$0xff]
  %v741 = vld [vmem:[%s10 + $0x58] sm:$0xff]
  %v742 = vld [vmem:[%s10 + $0x60] sm:$0xff]
  %v743 = vld [vmem:[%s10 + $0x68] sm:$0xff]
  %v744 = vld [vmem:[%s10 + $0x70] sm:$0xff]
  %v745 = vld [vmem:[%s10 + $0x78] sm:$0xff]
  %v746 = vld [vmem:[%s10 + $0x80] sm:$0xff]
  %v747 = vld [vmem:[%s10 + $0x88] sm:$0xff]
  %v748 = vld [vmem:[%s10 + $0x90] sm:$0xff]
  %v749 = vld [vmem:[%s10 + $0x98] sm:$0xff]
  %v750 = vld [vmem:[%s10 + $0xa0] sm:$0xff]
  %v751 = vld [vmem:[%s10 + $0xa8] sm:$0xff]
  %v752 = vld [vmem:[%s10 + $0xb0] sm:$0xff]
  %v753 = vld [vmem:[%s10 + $0xb8] sm:$0xff]
  %v754 = vld [vmem:[%s10 + $0xc0] sm:$0xff]
  %v755 = vld [vmem:[%s10 + $0xc8] sm:$0xff]
  %v756 = vld [vmem:[%s10 + $0xd0] sm:$0xff]
  %v757 = vld [vmem:[%s10 + $0xd8] sm:$0xff]
  %v758 = vld [vmem:[%s10 + $0xe0] sm:$0xff]
  %v759 = vld [vmem:[%s10 + $0xe8] sm:$0xff]
  %v760 = vld [vmem:[%s10 + $0xf0] sm:$0xff]
  %v761 = vld [vmem:[%s10 + $0xf8] sm:$0xff]
  %762 = vmatprep.subr.mxu0 0.0
  %763 = vmatpush1.msra.mxu0 %v730
  %764 = vmatprep.subr.mxu0 0.0
  %765 = vmatpush1.msra.mxu0 %v731
  %766 = vmatprep.subr.mxu0 0.0
  %767 = vmatpush1.msra.mxu0 %v732
  %768 = vmatprep.subr.mxu0 0.0
  %769 = vmatpush1.msra.mxu0 %v733
  %770 = vmatprep.subr.mxu0 0.0
  %771 = vmatpush1.msra.mxu0 %v734
  %772 = vmatprep.subr.mxu0 0.0
  %773 = vmatpush1.msra.mxu0 %v735
  %774 = vmatprep.subr.mxu0 0.0
  %775 = vmatpush1.msra.mxu0 %v736
  %776 = vmatprep.subr.mxu0 0.0
  %777 = vmatpush1.msra.mxu0 %v737
  %778 = vmatprep.subr.mxu0 0.0
  %779 = vmatpush1.msra.mxu0 %v738
  %780 = vmatprep.subr.mxu0 0.0
  %781 = vmatpush1.msra.mxu0 %v739
  %782 = vmatprep.subr.mxu0 0.0
  %783 = vmatpush1.msra.mxu0 %v740
  %784 = vmatprep.subr.mxu0 0.0
  %785 = vmatpush1.msra.mxu0 %v741
  %786 = vmatprep.subr.mxu0 0.0
  %787 = vmatpush1.msra.mxu0 %v742
  %788 = vmatprep.subr.mxu0 0.0
  %789 = vmatpush1.msra.mxu0 %v743
  %790 = vmatprep.subr.mxu0 0.0
  %791 = vmatpush1.msra.mxu0 %v744
  %792 = vmatprep.subr.mxu0 0.0
  %793 = vmatpush1.msra.mxu0 %v745
  %794 = vmatprep.subr.mxu0 0.0
  %795 = vmatpush1.msra.mxu0 %v746
  %796 = vmatprep.subr.mxu0 0.0
  %797 = vmatpush1.msra.mxu0 %v747
  %798 = vmatprep.subr.mxu0 0.0
  %799 = vmatpush1.msra.mxu0 %v748
  %800 = vmatprep.subr.mxu0 0.0
  %801 = vmatpush1.msra.mxu0 %v749
  %802 = vmatprep.subr.mxu0 0.0
  %803 = vmatpush1.msra.mxu0 %v750
  %804 = vmatprep.subr.mxu0 0.0
  %805 = vmatpush1.msra.mxu0 %v751
  %806 = vmatprep.subr.mxu0 0.0
  %807 = vmatpush1.msra.mxu0 %v752
  %808 = vmatprep.subr.mxu0 0.0
  %809 = vmatpush1.msra.mxu0 %v753
  %810 = vmatprep.subr.mxu0 0.0
  %811 = vmatpush1.msra.mxu0 %v754
  %812 = vmatprep.subr.mxu0 0.0
  %813 = vmatpush1.msra.mxu0 %v755
  %814 = vmatprep.subr.mxu0 0.0
  %815 = vmatpush1.msra.mxu0 %v756
  %816 = vmatprep.subr.mxu0 0.0
  %817 = vmatpush1.msra.mxu0 %v757
  %818 = vmatprep.subr.mxu0 0.0
  %819 = vmatpush1.msra.mxu0 %v758
  %820 = vmatprep.subr.mxu0 0.0
  %821 = vmatpush1.msra.mxu0 %v759
  %822 = vmatprep.subr.mxu0 0.0
  %823 = vmatpush1.msra.mxu0 %v760
  %824 = vmatprep.subr.mxu0 0.0
  %825 = vmatpush1.msra.mxu0 %v761
  %826 = vmatprep.mubr.f32.mxu0 %v697
  %827 = vmatmul.mubr.f32.gmra.mrb[0].mxu0 %v696
  %v828 = vpop.f32.mrb[0].mxu0
  %v829 = vadd.f32 0.0, %v828
  %v830 = vpop.f32.mrb[0].mxu0
  %831 = vdwg.mxu0
  %832 = vmatprep.subr.mxu0 0.0
  %833 = vmatpush1.msra.mxu0 %v698
  %834 = vmatprep.subr.mxu0 0.0
  %835 = vmatpush1.msra.mxu0 %v699
  %836 = vmatprep.subr.mxu0 0.0
  %837 = vmatpush1.msra.mxu0 %v700
  %838 = vmatprep.subr.mxu0 0.0
  %839 = vmatpush1.msra.mxu0 %v701
  %840 = vmatprep.subr.mxu0 0.0
  %841 = vmatpush1.msra.mxu0 %v702
  %842 = vmatprep.subr.mxu0 0.0
  %843 = vmatpush1.msra.mxu0 %v703
  %844 = vmatprep.subr.mxu0 0.0
  %845 = vmatpush1.msra.mxu0 %v704
  %846 = vmatprep.subr.mxu0 0.0
  %847 = vmatpush1.msra.mxu0 %v705
  %848 = vmatprep.subr.mxu0 0.0
  %849 = vmatpush1.msra.mxu0 %v706
  %850 = vmatprep.subr.mxu0 0.0
  %851 = vmatpush1.msra.mxu0 %v707
  %852 = vmatprep.subr.mxu0 0.0
  %853 = vmatpush1.msra.mxu0 %v708
  %854 = vmatprep.subr.mxu0 0.0
  %855 = vmatpush1.msra.mxu0 %v709
  %856 = vmatprep.subr.mxu0 0.0
  %857 = vmatpush1.msra.mxu0 %v710
  %858 = vmatprep.subr.mxu0 0.0
  %859 = vmatpush1.msra.mxu0 %v711
  %860 = vmatprep.subr.mxu0 0.0
  %861 = vmatpush1.msra.mxu0 %v712
  %862 = vmatprep.subr.mxu0 0.0
  %863 = vmatpush1.msra.mxu0 %v713
  %864 = vmatprep.subr.mxu0 0.0
  %865 = vmatpush1.msra.mxu0 %v714
  %866 = vmatprep.subr.mxu0 0.0
  %867 = vmatpush1.msra.mxu0 %v715
  %868 = vmatprep.subr.mxu0 0.0
  %869 = vmatpush1.msra.mxu0 %v716
  %870 = vmatprep.subr.mxu0 0.0
  %871 = vmatpush1.msra.mxu0 %v717
  %872 = vmatprep.subr.mxu0 0.0
  %873 = vmatpush1.msra.mxu0 %v718
  %874 = vmatprep.subr.mxu0 0.0
  %875 = vmatpush1.msra.mxu0 %v719
  %876 = vmatprep.subr.mxu0 0.0
  %877 = vmatpush1.msra.mxu0 %v720
  %878 = vmatprep.subr.mxu0 0.0
  %879 = vmatpush1.msra.mxu0 %v721
  %880 = vmatprep.subr.mxu0 0.0
  %881 = vmatpush1.msra.mxu0 %v722
  %882 = vmatprep.subr.mxu0 0.0
  %883 = vmatpush1.msra.mxu0 %v723
  %884 = vmatprep.subr.mxu0 0.0
  %885 = vmatpush1.msra.mxu0 %v724
  %886 = vmatprep.subr.mxu0 0.0
  %887 = vmatpush1.msra.mxu0 %v725
  %888 = vmatprep.subr.mxu0 0.0
  %889 = vmatpush1.msra.mxu0 %v726
  %890 = vmatprep.subr.mxu0 0.0
  %891 = vmatpush1.msra.mxu0 %v727
  %892 = vmatprep.subr.mxu0 0.0
  %893 = vmatpush1.msra.mxu0 %v728
  %894 = vmatprep.subr.mxu0 0.0
  %895 = vmatpush1.msra.mxu0 %v729
  %896 = vmatprep.mubr.f32.mxu0 %v548
  %897 = vmatmul.mubr.f32.gmra.mrb[0].mxu0 %v547
  %v898 = vpop.f32.mrb[0].mxu0
  %v899 = vadd.f32 %v829, %v898
  %v900 = vpop.f32.mrb[0].mxu0
  %901 = vdwg.mxu0
  %v902 = vld [vmem:[%s11] sm:$0x1]
  %v904 = vlaneseq
  %v905 = vshrl.u32 %v904, 7
  %v906 = vsub.s32 0, %v905
  %v907 = vrot.slane %v902, %v906
  %v909 = vadd.f32 %v899, %v907
  %vm910 = vcmask 15360
  %911 = vst.msk [vmem:[%s12] sm:$0xff] %vm910, %v909
  // Predicated region
  $region50: #{critic_td3_forward.1} parent=0 // pred_check
    _
  $region51: #{critic_td3_forward.1} parent=0 // pred_check_branch
    %913 = sbr.rel (0) target = $region53
  $region52: #{critic_td3_forward.1} parent=0 // pred_region
    _
  $region53: #{critic_td3_forward.1} parent=0 // pred_fallthru
    _
  // Predicated region
  $region54: #{critic_td3_forward.1} parent=0 // pred_check
    _
  $region55: #{critic_td3_forward.1} parent=0 // pred_check_branch
    %915 = sbr.rel (0) target = $region57
  $region56: #{critic_td3_forward.1} parent=0 // pred_region
    _
  $region57: #{critic_td3_forward.1} parent=0 // pred_fallthru
    _

</llo_original>
